<compile_context>
chip_gen: v5e
topology: v5e:2x2
jax: 0.10.0
libtpu: 0.0.40
codegen_flags: <defaults>
</compile_context>

<pallas_src>
import jax
import jax.numpy as jnp
from jax.experimental import pallas as pl
from jax.experimental.pallas import tpu as pltpu


def _planar_logdet_kernel(z_ref, w_ref, p_ref, o_ref):
    """One row tile: z_ref (TN, D), w_ref (1, D), p_ref (2,) SMEM, o_ref (TN, 1)."""
    z = z_ref[...].astype(jnp.float32)   # (TN, D); upcast in VMEM if input is bf16
    w = w_ref[...]                       # (1, D); resident across grid steps
    b = p_ref[0]                         # scalar bias
    ws = p_ref[1]                        # scalar <weight, scale>

    # activation = z @ w.T + b  (single lane reduction over D)
    act = jnp.sum(z * w, axis=-1, keepdims=True) + b           # (TN, 1)
    t = jnp.tanh(act)                                          # EUP
    # det_grad = 1 + psi @ s.T = 1 + (1 - tanh(act)^2) * <w, s>
    det_grad = 1.0 + (1.0 - t * t) * ws                        # (TN, 1)
    o_ref[...] = jnp.log(jnp.abs(det_grad) + 1e-7)             # safe_log(|det|)


def planar_flow_log_det_jacobian(z, weight, bias, scale, *, block_rows=1024):
    """z: (N, D), weight: (1, D), bias: (1,), scale: (1, D) -> (N, 1) float32."""
    N, D = z.shape
    block_rows = max(8, (block_rows // 8) * 8)       # keep tile a multiple of 8
    # Single exact-size block for small N, otherwise large row tiles (keeps the
    # double-buffered z tile tiny relative to VMEM on all of v5e/v6e/v7x).
    tn = N if N <= block_rows else block_rows
    grid = (pl.cdiv(N, tn),)

    weight_f32 = weight.astype(jnp.float32).reshape(1, D)
    scale_f32 = scale.astype(jnp.float32).reshape(1, D)
    # SMEM scalar params: [bias, <weight, scale>]
    ws = jnp.sum(weight_f32 * scale_f32)
    params = jnp.concatenate(
        [bias.astype(jnp.float32).reshape(1), ws.reshape(1)])

    itemsize = jnp.dtype(z.dtype).itemsize
    cost = pl.CostEstimate(
        flops=2 * N * D + 8 * N,
        transcendentals=2 * N,
        bytes_accessed=N * D * itemsize + N * 4 + D * 4 + 8,
    )

    return pl.pallas_call(
        _planar_logdet_kernel,
        out_shape=jax.ShapeDtypeStruct((N, 1), jnp.float32),
        grid_spec=pl.GridSpec(
            grid=grid,
            in_specs=[
                pl.BlockSpec((tn, D), lambda i: (i, 0)),             # z row tile
                pl.BlockSpec((1, D), lambda i: (0, 0)),              # weight (resident)
                pl.BlockSpec(memory_space=pltpu.MemorySpace.SMEM),   # [bias, <w,s>]
            ],
            out_specs=pl.BlockSpec((tn, 1), lambda i: (i, 0)),
        ),
        compiler_params=pltpu.CompilerParams(
            dimension_semantics=("parallel",),
        ),
        cost_estimate=cost,
    )(z, weight_f32, params)


def _reference(z, weight, bias, scale):
    hp = jax.lax.Precision.HIGHEST
    act = jnp.dot(z, weight.T, precision=hp) + bias
    psi = (1.0 - jnp.tanh(act) ** 2) * weight
    det_grad = 1.0 + jnp.dot(psi, scale.T, precision=hp)
    return jnp.log(jnp.abs(det_grad) + 1e-7)


if __name__ == "__main__":
    key = jax.random.PRNGKey(0)
    k_z, k_w, k_b, k_s, k_z2 = jax.random.split(key, 5)

    # Small shapes consistent with the module: batch N=8, hidden D=32.
    N, D = 8, 32
    z = jax.random.normal(k_z, (N, D), dtype=jnp.float32)
    weight = 0.1 * jax.random.normal(k_w, (1, D), dtype=jnp.float32)
    bias = 0.1 * jax.random.normal(k_b, (1,), dtype=jnp.float32)
    scale = 0.1 * jax.random.normal(k_s, (1, D), dtype=jnp.float32)

    out = jax.block_until_ready(
        planar_flow_log_det_jacobian(z, weight, bias, scale))
    ref = _reference(z, weight, bias, scale)
    assert out.shape == (N, 1)
    assert jnp.allclose(out, ref, atol=1e-5, rtol=1e-5)

    # Multi-tile path (ragged last block) to exercise the pipelined grid.
    N2 = 300
    z2 = jax.random.normal(k_z2, (N2, D), dtype=jnp.float32)
    out2 = jax.block_until_ready(
        planar_flow_log_det_jacobian(z2, weight, bias, scale, block_rows=128))
    ref2 = _reference(z2, weight, bias, scale)
    assert out2.shape == (N2, 1)
    assert jnp.allclose(out2, ref2, atol=1e-5, rtol=1e-5)

    print("KERNEL_OK")
</pallas_src>

<mosaic_0001>
module attributes {stable_mosaic.version = 11 : i64} {
  func.func @_planar_logdet_kernel(%arg0: i32, %arg1: memref<8x32xf32, #tpu.memory_space<vmem>>, %arg2: memref<1x32xf32, #tpu.memory_space<vmem>>, %arg3: memref<2xf32, #tpu.memory_space<smem>>, %arg4: memref<8x1xf32, #tpu.memory_space<vmem>>) attributes {dimension_semantics = [#tpu.dimension_semantics<parallel>], iteration_bounds = array<i64: 1>, scalar_prefetch = 0 : i64, scratch_operands = 0 : i64, tpu.core_type = #tpu.core_type<tc>, window_params = [{transform_indices = @transform_0, window_bounds = array<i64: 8, 32>}, {pipeline_mode = #tpu.pipeline_mode<synchronous>, transform_indices = @transform_1, window_bounds = array<i64: 1, 32>}, {transform_indices = @transform_2, window_bounds = array<i64: 2>}, {transform_indices = @transform_3, window_bounds = array<i64: 8, 1>}]} {
    %c0 = arith.constant 0 : index
    %c0_0 = arith.constant 0 : index
    %0 = vector.load %arg1[%c0, %c0_0] : memref<8x32xf32, #tpu.memory_space<vmem>>, vector<8x32xf32>
    %c0_1 = arith.constant 0 : index
    %c0_2 = arith.constant 0 : index
    %1 = vector.load %arg2[%c0_1, %c0_2] : memref<1x32xf32, #tpu.memory_space<vmem>>, vector<1x32xf32>
    %c0_3 = arith.constant 0 : index
    %2 = memref.load %arg3[%c0_3] : memref<2xf32, #tpu.memory_space<smem>>
    %c1 = arith.constant 1 : index
    %3 = memref.load %arg3[%c1] : memref<2xf32, #tpu.memory_space<smem>>
    %4 = vector.broadcast %1 : vector<1x32xf32> to vector<8x32xf32>
    %5 = arith.mulf %0, %4 : vector<8x32xf32>
    %cst = arith.constant dense<0.000000e+00> : vector<8xf32>
    %6 = vector.multi_reduction <add>, %5, %cst [1] : vector<8x32xf32> to vector<8xf32>
    %7 = vector.shape_cast %6 : vector<8xf32> to vector<8x1xf32>
    %8 = vector.broadcast %2 : f32 to vector<8x1xf32>
    %9 = arith.addf %7, %8 : vector<8x1xf32>
    %10 = math.tanh %9 : vector<8x1xf32>
    %11 = arith.mulf %10, %10 : vector<8x1xf32>
    %cst_4 = arith.constant 1.000000e+00 : f32
    %12 = vector.broadcast %cst_4 : f32 to vector<8x1xf32>
    %13 = arith.subf %12, %11 : vector<8x1xf32>
    %14 = vector.broadcast %3 : f32 to vector<8x1xf32>
    %15 = arith.mulf %13, %14 : vector<8x1xf32>
    %cst_5 = arith.constant 1.000000e+00 : f32
    %16 = vector.broadcast %cst_5 : f32 to vector<8x1xf32>
    %17 = arith.addf %16, %15 : vector<8x1xf32>
    %18 = math.absf %17 : vector<8x1xf32>
    %cst_6 = arith.constant 1.000000e-07 : f32
    %19 = vector.broadcast %cst_6 : f32 to vector<8x1xf32>
    %20 = arith.addf %18, %19 : vector<8x1xf32>
    %21 = math.log %20 : vector<8x1xf32>
    %c0_7 = arith.constant 0 : index
    %c0_8 = arith.constant 0 : index
    %22 = vector.load %arg4[%c0_7, %c0_8] : memref<8x1xf32, #tpu.memory_space<vmem>>, vector<8x1xf32>
    tpu.vector_store %arg4[%c0_7, %c0_8], %21 {strides = array<i32>} : memref<8x1xf32, #tpu.memory_space<vmem>>, vector<8x1xf32>,
    return
  }
  func.func @transform_0(%arg0: i32) -> (i32, i32) {
    %c0_i32 = arith.constant 0 : i32
    %c0_i32_0 = arith.constant 0 : i32
    return %arg0, %c0_i32 : i32, i32
  }
  func.func @transform_1(%arg0: i32) -> (i32, i32) {
    %c0_i32 = arith.constant 0 : i32
    %c0_i32_0 = arith.constant 0 : i32
    %c0_i32_1 = arith.constant 0 : i32
    return %c0_i32, %c0_i32_0 : i32, i32
  }
  func.func @transform_2(%arg0: i32) -> i32 {
    %c0_i32 = arith.constant 0 : i32
    %c0_i32_0 = arith.constant 0 : i32
    return %c0_i32 : i32
  }
  func.func @transform_3(%arg0: i32) -> (i32, i32) {
    %c0_i32 = arith.constant 0 : i32
    %c0_i32_0 = arith.constant 0 : i32
    return %arg0, %c0_i32 : i32, i32
  }
}

</mosaic_0001>

<llo_original>
// kernel: tpu_custom_call.1
$region0: #{tpu_custom_call.1}
  #allocation0 [shape = 'u32[]', space=smem, size = 0x4, offset = 0x4, fixed_abs, tag = 'smem constant byte address 0x4 - core index']
  #allocation1 [shape = 'u32[72,128]{1,0:T(1,128)}', space=vmem, size = 0x9000, scoped, tag = 'internal scratch']
  %s0 = inlined_call_operand.hbm [shape: f32[8,32], index: 0, kind: input, shape index: {}]
  %s1 = inlined_call_operand.hbm [shape: f32[1,32], index: 1, kind: input, shape index: {}]
  %s2 = inlined_call_operand.vmem [shape: f32[2], index: 2, kind: input, shape index: {}]
  %s3 = inlined_call_operand.vmem [shape: f32[8,1], index: 3, kind: output, shape index: {}]
  %s4 = sld [smem:[#allocation0]]
  $region34: #{tpu_custom_call.1} parent=0
    _
  %s6 = ssub.s32 1, %s4
  %s7 = scalar_select 0, %s6, %s4
  $region1: #{tpu_custom_call.1} parent=0
    #allocation2 [shape = 'u8[4096]{0}', space=vmem, size = 0x1000, scoped, tag = 'input window, operand 0, single buffered']
    #allocation3 [shape = 's32[1]{0}', space=sflag, size = 0x4, scoped, tag = 'scoped memory for tpu_custom_call.1']
    #allocation4 [shape = 's32[1]{0}', space=sflag, size = 0x4, scoped, tag = 'scoped memory for tpu_custom_call.1']
    #allocation5 [shape = 'u8[512]{0}', space=vmem, size = 0x400, scoped, tag = 'input window, operand 1, single buffered']
    #allocation6 [shape = 's32[1]{0}', space=sflag, size = 0x4, scoped, tag = 'scoped memory for tpu_custom_call.1']
    #allocation7 [shape = 'u8[512]{0}', space=smem, size = 0x200, scoped, tag = 'input window, operand 2, single buffered']
    %8 = vsyncpa [#allocation3], 0
    %9 = vsyncpa [#allocation6], 0
    %10 = vsyncpa [#allocation4], 0
    // Predicated region
    $region2: #{tpu_custom_call.1} parent=1 // pred_check
      _
    $region3: #{tpu_custom_call.1} parent=1 // pred_check_branch
      %12 = sbr.rel (0) target = $region5
    $region4: #{tpu_custom_call.1} parent=1 // pred_region
      %14 = vsyncadd [#allocation3], 0
      %s16 = sshll.u32 %s0, 4
      %s17 = int_to_ptr.hbm [resolvable:$true] %s16
      %s18 = sshll.u32 [#allocation2], 4
      %s19 = int_to_ptr.vmem [resolvable:$true] %s18
      %21 = dma.hbm_to_vmem [thread:$0]  %s17, 128, %s19, [#allocation3]
    $region5: #{tpu_custom_call.1} parent=1 // pred_fallthru
      _
    // Predicated region
    $region6: #{tpu_custom_call.1} parent=1 // pred_check
      _
    $region7: #{tpu_custom_call.1} parent=1 // pred_check_branch
      %23 = sbr.rel (0) target = $region9
    $region8: #{tpu_custom_call.1} parent=1 // pred_region
      %25 = vsyncadd [#allocation6], 0
      %s27 = sshll.u32 %s1, 4
      %s28 = int_to_ptr.hbm [resolvable:$true] %s27
      %s29 = sshll.u32 [#allocation5], 4
      %s30 = int_to_ptr.vmem [resolvable:$true] %s29
      %32 = dma.hbm_to_vmem [thread:$0]  %s28, 16, %s30, [#allocation6]
    $region9: #{tpu_custom_call.1} parent=1 // pred_fallthru
      _
    // Predicated region
    $region10: #{tpu_custom_call.1} parent=1 // pred_check
      _
    $region11: #{tpu_custom_call.1} parent=1 // pred_check_branch
      %34 = sbr.rel (0) target = $region13
    $region12: #{tpu_custom_call.1} parent=1 // pred_region
      %36 = vsyncadd [#allocation4], 0
      %s38 = sshll.u32 %s2, 4
      %s39 = int_to_ptr.vmem [resolvable:$true] %s38
      %41 = dma.vmem_to_smem %s39, 16, [#allocation7], [#allocation4]
    $region13: #{tpu_custom_call.1} parent=1 // pred_fallthru
      _
    // Predicated region
    $region14: #{tpu_custom_call.1} parent=1 // pred_check
      _
    $region15: #{tpu_custom_call.1} parent=1 // pred_check_branch
      %43 = sbr.rel (0) target = $region17
    $region16: #{tpu_custom_call.1} parent=1 // pred_region
      %45 = dma.done [#allocation3], 128
    $region17: #{tpu_custom_call.1} parent=1 // pred_fallthru
      _
    // Predicated region
    $region18: #{tpu_custom_call.1} parent=1 // pred_check
      _
    $region19: #{tpu_custom_call.1} parent=1 // pred_check_branch
      %47 = sbr.rel (0) target = $region21
    $region20: #{tpu_custom_call.1} parent=1 // pred_region
      %49 = dma.done [#allocation6], 16
    $region21: #{tpu_custom_call.1} parent=1 // pred_fallthru
      _
    // Predicated region
    $region22: #{tpu_custom_call.1} parent=1 // pred_check
      _
    $region23: #{tpu_custom_call.1} parent=1 // pred_check_branch
      %51 = sbr.rel (0) target = $region25
    $region24: #{tpu_custom_call.1} parent=1 // pred_region
      %53 = dma.done [#allocation4], 16
    $region25: #{tpu_custom_call.1} parent=1 // pred_fallthru
      _
    %54 = sfence
    %v55 = vld [vmem:[#allocation2] sm:$0xff]
    %v56 = vld [vmem:[#allocation5] sm:$0x1]
    %s57 = sld [smem:[#allocation7]]
    %s58 = sld [smem:[#allocation7 + $0x1]]
    %v60 = vperm.slane %v56, 0
    %v62 = vmul.f32 %v55, %v60
    %vm63 = vcmask 261120
    %v64 = vsel %vm63, %v62, 0.0
    %65 = vadd.xlane.f32.xlu0 %v64
    %v66 = vpop.xlane.xlu0 %65
    %v67 = vstv %s57
    %v68 = vadd.f32 %v66, %v67
    %v69 = vtanh.pop %v68
    %v70 = vmul.f32 %v69, %v69
    %v71 = vsub.f32 1.0, %v70
    %v72 = vstv %s58
    %v73 = vmul.f32 %v71, %v72
    %v74 = vadd.f32 %v73, 1.0
    %v75 = vand.u32 2147483647, %v74
    %v76 = vadd.f32 %v75, 1e-07
    %v77 = vlog2.pop %v76
    %v78 = vmul.f32 %v77, 0.6931472
    %vm79 = vcmask 7168
    %80 = vst.msk [vmem:[%s3] sm:$0xff] %vm79, %v78
    // Predicated region
    $region26: #{tpu_custom_call.1} parent=1 // pred_check
      _
    $region27: #{tpu_custom_call.1} parent=1 // pred_check_branch
      %82 = sbr.rel (0) target = $region29
    $region28: #{tpu_custom_call.1} parent=1 // pred_region
      _
    $region29: #{tpu_custom_call.1} parent=1 // pred_fallthru
      _
    // Predicated region
    $region30: #{tpu_custom_call.1} parent=1 // pred_check
      _
    $region31: #{tpu_custom_call.1} parent=1 // pred_check_branch
      %84 = sbr.rel (0) target = $region33
    $region32: #{tpu_custom_call.1} parent=1 // pred_region
      _
    $region33: #{tpu_custom_call.1} parent=1 // pred_fallthru
      _
    %85 = vsyncpa [#allocation3], 1
    %86 = vsyncpa [#allocation6], 1
    %87 = vsyncpa [#allocation4], 1

</llo_original>
